<compile_context>
chip_gen: v5e
topology: v5e:2x2
jax: 0.10.0
libtpu: 0.0.40
codegen_flags: <defaults>
</compile_context>

<pallas_src>
import jax
import jax.numpy as jnp
from jax import lax
from jax.experimental import pallas as pl
from jax.experimental.pallas import tpu as pltpu


def _round_up(n, m):
    return ((n + m - 1) // m) * m


def patch_proj_kernel(x_ref, w_ref, b_ref, o_ref):
    # x_ref: (1, TM, K) patch tile; w_ref: (E, K) resident weight;
    # b_ref: (E, 1) bias; o_ref: (1, E, TM) channel-major output tile.
    acc = lax.dot_general(
        w_ref[...], x_ref[0],
        dimension_numbers=(((1,), (1,)), ((), ())),   # contract on K -> (E, TM)
        preferred_element_type=jnp.float32,
    )
    o_ref[0] = (acc + b_ref[...]).astype(o_ref.dtype)


def patch_embed_forward(x, weight, bias, patch_size, *, tm=2048, use_bf16=False):
    """Swin PatchEmbed forward.

    x: [B, C, H, W]; weight: [E, C, ph, pw]; bias: [E].
    Returns NCHW [B, E, ceil(H/ph), ceil(W/pw)] (input zero-padded like F.pad).
    """
    B, C, H, W = x.shape
    E = weight.shape[0]
    ph, pw = patch_size
    out_dtype = x.dtype

    # --- spatial padding so H, W are multiples of the patch size (F.pad equiv) ---
    pad_h = (-H) % ph
    pad_w = (-W) % pw
    if pad_h or pad_w:
        x = jnp.pad(x, ((0, 0), (0, 0), (0, pad_h), (0, pad_w)))
    Hp, Wp = (H + pad_h) // ph, (W + pad_w) // pw

    # --- glue: extract non-overlapping patches, K ordered (c, kh, kw) ---
    # [B, C, Hp, ph, Wp, pw] -> [B, Hp, Wp, C, ph, pw] -> [B, Mb, K]
    K = C * ph * pw
    Mb = Hp * Wp
    xr = x.reshape(B, C, Hp, ph, Wp, pw)
    xr = jnp.transpose(xr, (0, 2, 4, 1, 3, 5))
    patches = xr.reshape(B, Mb, K)

    # Conv weight [E, C, ph, pw] already matches the (c, kh, kw) K ordering.
    w2d = weight.reshape(E, K)
    b2d = bias.reshape(E, 1).astype(jnp.float32)

    if use_bf16:  # optional fast path: bf16 operands, f32 accumulator.
        patches = patches.astype(jnp.bfloat16)
        w2d = w2d.astype(jnp.bfloat16)

    # --- M tiling: large, near-even, lane-aligned tiles over Hp*Wp ---
    if Mb <= tm:
        TM, grid_m, Mp = Mb, 1, Mb           # block == full dim; no M padding
    else:
        grid_m = pl.cdiv(Mb, tm)
        TM = _round_up(pl.cdiv(Mb, grid_m), 128)   # lane-dense, minimal padding
        grid_m = pl.cdiv(Mb, TM)
        Mp = grid_m * TM
    if Mp != Mb:
        patches = jnp.pad(patches, ((0, 0), (0, Mp - Mb), (0, 0)))

    in_elem = 2 if use_bf16 else 4
    out_elem = jnp.dtype(out_dtype).itemsize
    vmem_bytes = (2 * TM * K * in_elem          # double-buffered patch tile
                  + E * K * in_elem             # resident weight
                  + E * 128 * 4                 # bias (lane-padded in VMEM)
                  + 2 * E * TM * out_elem)      # double-buffered output tile
    vmem_limit = int(min(max(4 * vmem_bytes, 16 << 20), 48 << 20))

    cost = pl.CostEstimate(
        flops=2 * B * Mb * K * E,
        transcendentals=0,
        bytes_accessed=(B * Mb * K + E * K) * in_elem + E * 4 + B * Mb * E * out_elem,
    )

    out = pl.pallas_call(
        patch_proj_kernel,
        out_shape=jax.ShapeDtypeStruct((B, E, Mp), out_dtype),
        grid_spec=pl.GridSpec(
            grid=(B, grid_m),
            in_specs=[
                pl.BlockSpec((1, TM, K), lambda b, i: (b, i, 0)),   # K unpadded
                pl.BlockSpec((E, K), lambda b, i: (0, 0)),          # resident
                pl.BlockSpec((E, 1), lambda b, i: (0, 0)),          # resident
            ],
            out_specs=pl.BlockSpec((1, E, TM), lambda b, i: (b, 0, i)),
        ),
        compiler_params=pltpu.CompilerParams(
            dimension_semantics=("parallel", "parallel"),
            # let the pure transpose/reshape producing `patches` fuse into the
            # kernel's input DMA instead of a separate HBM round trip.
            allow_input_fusion=[True, False, False],
            vmem_limit_bytes=vmem_limit,
        ),
        cost_estimate=cost,
    )(patches, w2d, b2d)

    # Output is already channel-major: slice M padding, reshape -> NCHW. No transpose.
    if Mp != Mb:
        out = out[:, :, :Mb]
    return out.reshape(B, E, Hp, Wp)


if __name__ == "__main__":
    key = jax.random.PRNGKey(0)
    kx, kw, kb, kx2 = jax.random.split(key, 4)

    patch = (4, 4)
    B, C, E = 2, 4, 32

    def reference(x, w, b, patch):
        ph, pw = patch
        H, W = x.shape[2], x.shape[3]
        xp = jnp.pad(x, ((0, 0), (0, 0), (0, (-H) % ph), (0, (-W) % pw)))
        y = lax.conv_general_dilated(
            xp, w, window_strides=patch, padding="VALID",
            dimension_numbers=("NCHW", "OIHW", "NCHW"))
        return y + b.reshape(1, -1, 1, 1)

    weight = jax.random.normal(kw, (E, C, patch[0], patch[1]), jnp.float32) * 0.02
    bias = jax.random.normal(kb, (E,), jnp.float32) * 0.02

    # Case 1: divisible H/W, single M tile per image.
    x1 = jax.random.normal(kx, (B, C, 16, 16), jnp.float32)
    out1 = jax.jit(lambda a, w, b: patch_embed_forward(a, w, b, patch))(x1, weight, bias)
    out1 = jax.block_until_ready(out1)
    assert out1.shape == (B, E, 4, 4)
    assert jnp.allclose(out1, reference(x1, weight, bias, patch), atol=1e-4, rtol=1e-4)

    # Case 2: non-divisible H/W (spatial pad) + multi-tile M grid (+ M pad).
    x2 = jax.random.normal(kx2, (B, C, 62, 58), jnp.float32)
    out2 = jax.jit(lambda a, w, b: patch_embed_forward(a, w, b, patch, tm=128))(
        x2, weight, bias)
    out2 = jax.block_until_ready(out2)
    assert out2.shape == (B, E, 16, 15)
    assert jnp.allclose(out2, reference(x2, weight, bias, patch), atol=1e-4, rtol=1e-4)

    # Case 3: optional bf16 operand path (f32 accumulator), relaxed tolerance.
    out3 = jax.jit(lambda a, w, b: patch_embed_forward(a, w, b, patch, use_bf16=True))(
        x1, weight, bias)
    out3 = jax.block_until_ready(out3)
    assert jnp.allclose(out3, reference(x1, weight, bias, patch), atol=5e-2, rtol=5e-2)

    print("KERNEL_OK")
</pallas_src>

<mosaic_0001>
module attributes {stable_mosaic.version = 11 : i64} {
  func.func @patch_proj_kernel(%arg0: i32, %arg1: i32, %arg2: memref<1x16x64xf32, #tpu.memory_space<vmem>>, %arg3: memref<32x64xf32, #tpu.memory_space<vmem>>, %arg4: memref<32x1xf32, #tpu.memory_space<vmem>>, %arg5: memref<1x32x16xf32, #tpu.memory_space<vmem>>) attributes {dimension_semantics = [#tpu.dimension_semantics<parallel>, #tpu.dimension_semantics<parallel>], iteration_bounds = array<i64: 2, 1>, scalar_prefetch = 0 : i64, scratch_operands = 0 : i64, tpu.core_type = #tpu.core_type<tc>, window_params = [{transform_indices = @transform_0, window_bounds = array<i64: 1, 16, 64>}, {pipeline_mode = #tpu.pipeline_mode<synchronous>, transform_indices = @transform_1, window_bounds = array<i64: 32, 64>}, {pipeline_mode = #tpu.pipeline_mode<synchronous>, transform_indices = @transform_2, window_bounds = array<i64: 32, 1>}, {transform_indices = @transform_3, window_bounds = array<i64: 1, 32, 16>}]} {
    %c0 = arith.constant 0 : index
    %c0_0 = arith.constant 0 : index
    %0 = vector.load %arg3[%c0, %c0_0] : memref<32x64xf32, #tpu.memory_space<vmem>>, vector<32x64xf32>
    %c0_1 = arith.constant 0 : index
    %c0_2 = arith.constant 0 : index
    %c0_3 = arith.constant 0 : index
    %1 = vector.load %arg2[%c0_1, %c0_2, %c0_3] : memref<1x16x64xf32, #tpu.memory_space<vmem>>, vector<1x16x64xf32>
    %2 = vector.shape_cast %1 : vector<1x16x64xf32> to vector<16x64xf32>
    %cst = arith.constant dense<0.000000e+00> : vector<32x16xf32>
    %3 = tpu.matmul %0, %2, %cst {dimension_numbers = #tpu.dot_dimension_numbers<[1], [1], [0], [0], [0, 0, 1, 0], [], []>} : vector<32x64xf32>, vector<16x64xf32>, vector<32x16xf32> -> vector<32x16xf32>
    %c0_4 = arith.constant 0 : index
    %c0_5 = arith.constant 0 : index
    %4 = vector.load %arg4[%c0_4, %c0_5] : memref<32x1xf32, #tpu.memory_space<vmem>>, vector<32x1xf32>
    %5 = vector.broadcast %4 : vector<32x1xf32> to vector<32x16xf32>
    %6 = arith.addf %3, %5 : vector<32x16xf32>
    %c0_6 = arith.constant 0 : index
    %c0_7 = arith.constant 0 : index
    %c0_8 = arith.constant 0 : index
    %7 = vector.load %arg5[%c0_6, %c0_7, %c0_8] : memref<1x32x16xf32, #tpu.memory_space<vmem>>, vector<1x32x16xf32>
    %8 = vector.shape_cast %7 : vector<1x32x16xf32> to vector<32x16xf32>
    %9 = vector.shape_cast %6 : vector<32x16xf32> to vector<1x32x16xf32>
    tpu.vector_store %arg5[%c0_6, %c0_7, %c0_8], %9 {strides = array<i32>} : memref<1x32x16xf32, #tpu.memory_space<vmem>>, vector<1x32x16xf32>,
    return
  }
  func.func @transform_0(%arg0: i32, %arg1: i32) -> (i32, i32, i32) {
    %c0_i32 = arith.constant 0 : i32
    %c0_i32_0 = arith.constant 0 : i32
    return %arg0, %arg1, %c0_i32 : i32, i32, i32
  }
  func.func @transform_1(%arg0: i32, %arg1: i32) -> (i32, i32) {
    %c0_i32 = arith.constant 0 : i32
    %c0_i32_0 = arith.constant 0 : i32
    %c0_i32_1 = arith.constant 0 : i32
    return %c0_i32, %c0_i32_0 : i32, i32
  }
  func.func @transform_2(%arg0: i32, %arg1: i32) -> (i32, i32) {
    %c0_i32 = arith.constant 0 : i32
    %c0_i32_0 = arith.constant 0 : i32
    %c0_i32_1 = arith.constant 0 : i32
    return %c0_i32, %c0_i32_0 : i32, i32
  }
  func.func @transform_3(%arg0: i32, %arg1: i32) -> (i32, i32, i32) {
    %c0_i32 = arith.constant 0 : i32
    %c0_i32_0 = arith.constant 0 : i32
    return %arg0, %c0_i32, %arg1 : i32, i32, i32
  }
}

</mosaic_0001>

<llo_original>
// kernel: _lambda_.1
$region0: #{_lambda_.1}
  #allocation0 [shape = 'u32[]', space=smem, size = 0x4, offset = 0x4, fixed_abs, tag = 'smem constant byte address 0x4 - core index']
  #allocation1 [shape = 'u32[72,128]{1,0:T(1,128)}', space=vmem, size = 0x9000, scoped, tag = 'internal scratch']
  %s0 = inlined_call_operand.vmem [shape: f32[2,16,64], index: 0, kind: input, shape index: {}]
  %s1 = inlined_call_operand.vmem [shape: f32[32,64], index: 1, kind: input, shape index: {}]
  %s2 = inlined_call_operand.vmem [shape: f32[32,1], index: 2, kind: input, shape index: {}]
  %s3 = inlined_call_operand.vmem [shape: f32[2,32,16], index: 3, kind: output, shape index: {}]
  %s4 = sld [smem:[#allocation0]]
  $region45: #{_lambda_.1} parent=0
    _
  %s6 = ssub.s32 1, %s4
  %s7 = scalar_select 0, %s6, %s4
  loop: start=0, step=1, limit=4
  $region2: #{_lambda_.1} parent=0 // loop_pre_header
    _
  $region3: #{_lambda_.1} parent=0 // loop_header
    %s9 = sphi 0, %s13
    %p10 = scmp.ge.s32.totalorder %s9, 4
    %s16 = sphi 0, %s28
    %s17 = sphi 0, %s24
    %s18 = sphi 0, %s16
    %s19 = sphi 0, %s17
    %s20 = sphi 0, %s18
    %s21 = sphi 0, %s19
    %s33 = sphi 0, %s35
    %s36 = sphi 0, %s33
    %s37 = sphi 0, %s36
    %s53 = sphi 0, %s37
    %s57 = sphi 0, %s57
    %s59 = sphi 0, %s57
    %s60 = sphi 0, %s59
    %s74 = sphi 0, %s60
    %s78 = sphi 0, %s78
    %s80 = sphi 0, %s78
    %s81 = sphi 0, %s80
    %s95 = sphi 0, %s81
    %s103 = sphi 0, %s105
    %s106 = sphi 0, %s103
    %s107 = sphi 0, %s106
    %s123 = sphi 0, %s107
  $region4: #{_lambda_.1} parent=0 // loop_header_branch
    %12 = sbr.rel (%p10) target = $region8
  $region5: #{_lambda_.1} parent=0 // loop_body
    %s14 = ssub.s32 %s9, 1
    %s15 = ssub.s32 %s9, 2
    %s22 = sadd.s32 1, %s17
    %p23 = scmp.ge.s32.totalorder %s22, 1
    %s24 = scalar_select %p23, 0, %s22
    %s25 = sadd.s32 1, %s16
    %s26 = scalar_select %p23, %s25, %s16
    %p27 = scmp.ge.s32.totalorder %s26, 2
    %s28 = scalar_select %p27, 0, %s26
    %s29 = ssub.s32 %s16, %s28
    %s30 = ssub.s32 %s17, %s24
    %s31 = sor.u32 %s29, %s30
    %p32 = scmp.eq.s32.totalorder %s31, 0
    %s34 = sadd.s32 %s33, 1
    %s35 = scalar_select %p32, %s33, %s34
    %p38 = pneg %p32
    %p39 = scmp.eq.s32.totalorder %s9, 1
    %p40 = por %p38, %p39
    %p41 = scmp.ne.s32.totalorder %s33, %s36
    %p42 = scmp.eq.s32.totalorder %s9, 0
    %p43 = por %p41, %p42
    %p44 = scmp.ne.s32.totalorder %s33, %s36
    %p45 = scmp.eq.s32.totalorder %s14, 1
    %p46 = por %p44, %p45
    %p47 = scmp.ne.s32.totalorder %s36, %s37
    %p48 = scmp.eq.s32.totalorder %s14, 0
    %p49 = por %p47, %p48
    %p50 = scmp.ne.s32.totalorder %s36, %s37
    %p51 = scmp.eq.s32.totalorder %s15, 1
    %p52 = por %p50, %p51
    %p54 = scmp.ne.s32.totalorder %s37, %s53
    %p55 = scmp.eq.s32.totalorder %s15, 0
    %p56 = por %p54, %p55
    %s58 = sadd.s32 %s57, 1
    %p61 = scmp.eq.s32.totalorder %s9, 1
    %p62 = scmp.ne.s32.totalorder %s57, %s59
    %p63 = scmp.eq.s32.totalorder %s9, 0
    %p64 = por %p62, %p63
    %p65 = scmp.ne.s32.totalorder %s57, %s59
    %p66 = scmp.eq.s32.totalorder %s14, 1
    %p67 = por %p65, %p66
    %p68 = scmp.ne.s32.totalorder %s59, %s60
    %p69 = scmp.eq.s32.totalorder %s14, 0
    %p70 = por %p68, %p69
    %p71 = scmp.ne.s32.totalorder %s59, %s60
    %p72 = scmp.eq.s32.totalorder %s15, 1
    %p73 = por %p71, %p72
    %p75 = scmp.ne.s32.totalorder %s60, %s74
    %p76 = scmp.eq.s32.totalorder %s15, 0
    %p77 = por %p75, %p76
    %s79 = sadd.s32 %s78, 1
    %p82 = scmp.eq.s32.totalorder %s9, 1
    %p83 = scmp.ne.s32.totalorder %s78, %s80
    %p84 = scmp.eq.s32.totalorder %s9, 0
    %p85 = por %p83, %p84
    %p86 = scmp.ne.s32.totalorder %s78, %s80
    %p87 = scmp.eq.s32.totalorder %s14, 1
    %p88 = por %p86, %p87
    %p89 = scmp.ne.s32.totalorder %s80, %s81
    %p90 = scmp.eq.s32.totalorder %s14, 0
    %p91 = por %p89, %p90
    %p92 = scmp.ne.s32.totalorder %s80, %s81
    %p93 = scmp.eq.s32.totalorder %s15, 1
    %p94 = por %p92, %p93
    %p96 = scmp.ne.s32.totalorder %s81, %s95
    %p97 = scmp.eq.s32.totalorder %s15, 0
    %p98 = por %p96, %p97
    %s99 = ssub.s32 %s16, %s28
    %s100 = ssub.s32 %s17, %s24
    %s101 = sor.u32 %s99, %s100
    %p102 = scmp.eq.s32.totalorder %s101, 0
    %s104 = sadd.s32 %s103, 1
    %s105 = scalar_select %p102, %s103, %s104
    %p108 = pneg %p102
    %p109 = scmp.eq.s32.totalorder %s9, 1
    %p110 = por %p108, %p109
    %p111 = scmp.ne.s32.totalorder %s103, %s106
    %p112 = scmp.eq.s32.totalorder %s9, 0
    %p113 = por %p111, %p112
    %p114 = scmp.ne.s32.totalorder %s103, %s106
    %p115 = scmp.eq.s32.totalorder %s14, 1
    %p116 = por %p114, %p115
    %p117 = scmp.ne.s32.totalorder %s106, %s107
    %p118 = scmp.eq.s32.totalorder %s14, 0
    %p119 = por %p117, %p118
    %p120 = scmp.ne.s32.totalorder %s106, %s107
    %p121 = scmp.eq.s32.totalorder %s15, 1
    %p122 = por %p120, %p121
    %p124 = scmp.ne.s32.totalorder %s107, %s123
    %p125 = scmp.eq.s32.totalorder %s15, 0
    %p126 = por %p124, %p125
    %p127 = scmp.le.s32.totalorder 1, %s9
    %p128 = scmp.lt.s32.totalorder %s9, 3
    %p129 = pnand %p127, %p128
    %p130 = pneg %p129
    // Predicated region
    $region9: #{_lambda_.1} parent=5 // pred_check
      _
    $region10: #{_lambda_.1} parent=5 // pred_check_branch
      %132 = sbr.rel (%p129) target = $region12
    $region11: #{_lambda_.1} parent=5 // pred_region
      %s133 = ssub.s32 %s9, 1
      // Predicated region
      $region13: #{_lambda_.1} parent=11 // pred_check
        %p134 = pneg %p70
      $region14: #{_lambda_.1} parent=11 // pred_check_branch
        %136 = sbr.rel (%p134) target = $region16
      $region15: #{_lambda_.1} parent=11 // pred_region
        _
      $region16: #{_lambda_.1} parent=11 // pred_fallthru
        _
      // Predicated region
      $region17: #{_lambda_.1} parent=11 // pred_check
        %p137 = pneg %p91
      $region18: #{_lambda_.1} parent=11 // pred_check_branch
        %139 = sbr.rel (%p137) target = $region20
      $region19: #{_lambda_.1} parent=11 // pred_region
        _
      $region20: #{_lambda_.1} parent=11 // pred_fallthru
        _
    $region12: #{_lambda_.1} parent=5 // pred_fallthru
      _
    %p140 = scmp.lt.s32.totalorder %s9, 2
    // Predicated region
    $region21: #{_lambda_.1} parent=5 // pred_check
      %p141 = pneg %p140
    $region22: #{_lambda_.1} parent=5 // pred_check_branch
      %143 = sbr.rel (%p141) target = $region24
    $region23: #{_lambda_.1} parent=5 // pred_region
      // Predicated region
      $region25: #{_lambda_.1} parent=23 // pred_check
        %p144 = pneg %p43
      $region26: #{_lambda_.1} parent=23 // pred_check_branch
        %146 = sbr.rel (%p144) target = $region28
      $region27: #{_lambda_.1} parent=23 // pred_region
        %s147 = smul.u32 2, %s17
        %p148 = scmp.lt.s32.totalorder %s16, 1
        %s149 = scalar_select %p148, %s16, 1
        %p150 = scmp.lt.s32.totalorder %s147, 1
        %s151 = scalar_select %p150, %s147, 1
        %s152 = smul.addr %s149, 2
        %s153 = sadd.s32 %s151, %s152
        %s154 = smul.addr %s153, 8
        %s155 = scalar_lea.vmem %s0, %s154
        %s156 = smul.u32 2, %s17
      $region28: #{_lambda_.1} parent=23 // pred_fallthru
        _
    $region24: #{_lambda_.1} parent=5 // pred_fallthru
      _
    %p157 = scmp.le.s32.totalorder 1, %s9
    %p158 = scmp.lt.s32.totalorder %s9, 3
    %p159 = pnand %p157, %p158
    %p160 = pneg %p159
    // Predicated region
    $region29: #{_lambda_.1} parent=5 // pred_check
      _
    $region30: #{_lambda_.1} parent=5 // pred_check_branch
      %162 = sbr.rel (%p159) target = $region32
    $region31: #{_lambda_.1} parent=5 // pred_region
      %s163 = ssub.s32 %s9, 1
      %s164 = smul.u32 2, %s19
      %p165 = scmp.lt.s32.totalorder %s18, 1
      %s166 = scalar_select %p165, %s18, 1
      %p167 = scmp.lt.s32.totalorder %s164, 1
      %s168 = scalar_select %p167, %s164, 1
      %s169 = smul.addr %s166, 2
      %s170 = sadd.s32 %s168, %s169
      %s171 = smul.addr %s170, 8
      %s172 = scalar_lea.vmem %s0, %s171
      %p173 = pneg %p49
      %p174 = pneg %p46
      %p175 = pneg %p70
      %p176 = pneg %p67
      %p177 = pneg %p91
      %p178 = pneg %p88
      %p179 = pneg %p119
      %p180 = pneg %p116
      %p181 = scmp.lt.s32.totalorder %s18, 1
      %s182 = scalar_select %p181, %s18, 1
      %p183 = scmp.lt.s32.totalorder %s19, 0
      %s184 = scalar_select %p183, %s19, 0
      %s185 = smul.addr %s182, 4
      %s186 = sadd.s32 %s184, %s185
      %s187 = smul.addr %s186, 8
      %s188 = scalar_lea.vmem %s3, %s187
      %s189 = smul.u32 2, %s19
      %p190 = scmp.lt.s32.totalorder %s18, 1
      %s191 = scalar_select %p190, %s18, 1
      %p192 = scmp.lt.s32.totalorder %s189, 1
      %s193 = scalar_select %p192, %s189, 1
      %s194 = smul.addr %s191, 2
      %s195 = sadd.s32 %s193, %s194
      %s196 = smul.addr %s195, 8
      %s197 = scalar_lea.vmem %s0, %s196
      %s198 = smul.u32 2, %s19
      %p199 = scmp.lt.s32.totalorder %s18, 1
      %s200 = scalar_select %p199, %s18, 1
      %p201 = scmp.lt.s32.totalorder %s19, 0
      %s202 = scalar_select %p201, %s19, 0
      %s203 = smul.addr %s200, 4
      %s204 = sadd.s32 %s202, %s203
      %s205 = smul.addr %s204, 8
      %s206 = scalar_lea.vmem %s3, %s205
      %v207 = vld [vmem:[%s1] sm:$0xff]
      %v208 = vld [vmem:[%s1 + $0x8] sm:$0xff]
      %v209 = vld [vmem:[%s1 + $0x10] sm:$0xff]
      %v210 = vld [vmem:[%s1 + $0x18] sm:$0xff]
      %v211 = vld [vmem:[%s197] sm:$0xff]
      %v212 = vld [vmem:[%s197 + $0x8] sm:$0xff]
      %v213 = vld [vmem:[%s2] sm:$0xff]
      %v214 = vld [vmem:[%s2 + $0x8] sm:$0xff]
      %v215 = vld [vmem:[%s2 + $0x10] sm:$0xff]
      %v216 = vld [vmem:[%s2 + $0x18] sm:$0xff]
      %218 = vset.pattern.permute.xlu0 0
      %219 = vperm.xlu0 %218, %v213
      %v220 = vpop.permute.xlu0 %219
      %223 = vset.pattern.permute.xlu0 0
      %224 = vperm.xlu0 %223, %v214
      %v225 = vpop.permute.xlu0 %224
      %228 = vset.pattern.permute.xlu0 0
      %229 = vperm.xlu0 %228, %v215
      %v230 = vpop.permute.xlu0 %229
      %233 = vset.pattern.permute.xlu0 0
      %234 = vperm.xlu0 %233, %v216
      %v235 = vpop.permute.xlu0 %234
      %vm237 = vcmask 523264
      %v239 = vsel %vm237, %v207, 0
      %v242 = vsel %vm237, %v208, 0
      %v245 = vsel %vm237, %v209, 0
      %v248 = vsel %vm237, %v210, 0
      %v251 = vsel %vm237, %v211, 0
      %v254 = vsel %vm237, %v212, 0
      %256 = vmatpush.xpose.msra.mxu0 0.0
      %257 = vmatpush.xpose.msra.mxu0 0.0
      %258 = vmatpush.xpose.msra.mxu0 0.0
      %259 = vmatpush.xpose.msra.mxu0 0.0
      %260 = vmatpush.xpose.msra.mxu0 0.0
      %261 = vmatpush.xpose.msra.mxu0 0.0
      %262 = vmatpush.xpose.msra.mxu0 0.0
      %263 = vmatpush.xpose.msra.mxu0 0.0
      %264 = vmatpush.xpose.msra.mxu0 0.0
      %265 = vmatpush.xpose.msra.mxu0 0.0
      %266 = vmatpush.xpose.msra.mxu0 0.0
      %267 = vmatpush.xpose.msra.mxu0 0.0
      %268 = vmatpush.xpose.msra.mxu0 0.0
      %269 = vmatpush.xpose.msra.mxu0 0.0
      %270 = vmatpush.xpose.msra.mxu0 %v254
      %271 = vmatpush.xpose.msra.mxu0 %v251
      %272 = vmatmul.f32.gmra.mxu0 %v239
      %v273 = vpop.f32.mrf.mxu0
      %v274 = vadd.f32 %v220, %v273
      %275 = vmatmul.f32.gmra.mxu0 %v242
      %v276 = vpop.f32.mrf.mxu0
      %v277 = vadd.f32 %v225, %v276
      %278 = vmatmul.f32.gmra.mxu0 %v245
      %v279 = vpop.f32.mrf.mxu0
      %v280 = vadd.f32 %v230, %v279
      %281 = vmatmul.f32.gmra.mxu0 %v248
      %v282 = vpop.f32.mrf.mxu0
      %v283 = vadd.f32 %v235, %v282
      %284 = vdwg.mxu0
      %vm285 = vcmask 130048
      %286 = vst.msk [vmem:[%s206] sm:$0xff] %vm285, %v274
      %287 = vst.msk [vmem:[%s206 + $0x8] sm:$0xff] %vm285, %v277
      %288 = vst.msk [vmem:[%s206 + $0x10] sm:$0xff] %vm285, %v280
      %289 = vst.msk [vmem:[%s206 + $0x18] sm:$0xff] %vm285, %v283
      %p290 = scmp.lt.s32.totalorder %s18, 1
      %s291 = scalar_select %p290, %s18, 1
      %p292 = scmp.lt.s32.totalorder %s19, 0
      %s293 = scalar_select %p292, %s19, 0
      %s294 = smul.addr %s291, 4
      %s295 = sadd.s32 %s293, %s294
      %s296 = smul.addr %s295, 8
      %s297 = scalar_lea.vmem %s3, %s296
      // Predicated region
      $region33: #{_lambda_.1} parent=31 // pred_check
        %p298 = pneg %p116
      $region34: #{_lambda_.1} parent=31 // pred_check_branch
        %300 = sbr.rel (%p298) target = $region36
      $region35: #{_lambda_.1} parent=31 // pred_region
        _
      $region36: #{_lambda_.1} parent=31 // pred_fallthru
        _
    $region32: #{_lambda_.1} parent=5 // pred_fallthru
      _
    %p301 = scmp.le.s32.totalorder 2, %s9
    // Predicated region
    $region37: #{_lambda_.1} parent=5 // pred_check
      %p302 = pneg %p301
    $region38: #{_lambda_.1} parent=5 // pred_check_branch
      %304 = sbr.rel (%p302) target = $region40
    $region39: #{_lambda_.1} parent=5 // pred_region
      %s305 = ssub.s32 %s9, 2
      // Predicated region
      $region41: #{_lambda_.1} parent=39 // pred_check
        %p306 = pneg %p122
      $region42: #{_lambda_.1} parent=39 // pred_check_branch
        %308 = sbr.rel (%p306) target = $region44
      $region43: #{_lambda_.1} parent=39 // pred_region
        %p309 = scmp.lt.s32.totalorder %s20, 1
        %s310 = scalar_select %p309, %s20, 1
        %p311 = scmp.lt.s32.totalorder %s21, 0
        %s312 = scalar_select %p311, %s21, 0
        %s313 = smul.addr %s310, 4
        %s314 = sadd.s32 %s312, %s313
        %s315 = smul.addr %s314, 8
        %s316 = scalar_lea.vmem %s3, %s315
      $region44: #{_lambda_.1} parent=39 // pred_fallthru
        _
    $region40: #{_lambda_.1} parent=5 // pred_fallthru
      _
  $region6: #{_lambda_.1} parent=0 // loop_footer
    %s13 = sadd.s32 1, %s9
  $region7: #{_lambda_.1} parent=0 // loop_footer_branch
    %8 = sbr.rel target = $region3
  $region8: #{_lambda_.1} parent=0 // loop_exit
    _

</llo_original>
